<compile_context>
chip_gen: v5e
topology: v5e:2x2
jax: 0.10.0
libtpu: 0.0.40
codegen_flags: <defaults>
</compile_context>

<pallas_src>
import jax
import jax.numpy as jnp
import numpy as np
from jax.experimental import pallas as pl
from jax.experimental.pallas import tpu as pltpu

NEG_SLOPE = 0.01  # PyTorch nn.LeakyReLU default


def _leaky_relu(h):
    return jnp.where(h > 0, h, NEG_SLOPE * h)


def _round_up(n, m):
    return ((n + m - 1) // m) * m


def _pick_block_b(B):
    """Batch-tile size: big tiles amortize the ~0.35us grid-step overhead and
    MXU push/drain latency, but keep >=2 grid steps when the batch allows so
    the "parallel" axis can shard across the two TensorCores on v7x."""
    if B <= 16:
        return _round_up(max(B, 1), 8)
    bb = 512
    while bb > 8 and 2 * bb > B:
        bb //= 2
    return bb


def make_coupling_kernel(n_layers, depth, half, fused, n_params):
    """Kernel: all coupling layers fully unrolled inside one grid step.

    fused=True  -> the s-net and t-net share one MLP of width 2H (input
                   weights concatenated, hidden weights block-diagonal).
    fused=False -> separate s / t weight stacks, two dots per layer (used when
                   2H exceeds the MXU tile so zero-padding would be a 2x tax).
    """

    def kernel(*refs):
        x_ref, xc_ref = refs[0], refs[1]
        p = refs[2:2 + n_params]
        out_ref, ld_ref = refs[2 + n_params], refs[3 + n_params]

        if fused:
            (w_in_x, w_in_c, b_in, w_hid, b_hid,
             w_out_s, w_out_t, b_out_s, b_out_t) = p
        else:
            (w_in_x, w_in_c, b_in, w_hid, b_hid, w_out, b_out) = p

        cdt = w_in_x.dtype                      # matmul compute dtype (bf16/f32)
        xv = x_ref[...]                         # (bB, C) in f32
        x1 = xv[:, :half]                       # conditioning half (f32)
        x2 = xv[:, half:]                       # half to be transformed (f32)
        xc_c = xc_ref[...].astype(cdt)          # conditioner; matmul-only -> cdt
        logdet = jnp.zeros((xv.shape[0], 1), jnp.float32)

        for l in range(n_layers):               # n_layers == 2 -> fully unrolled
            x1_c = x1.astype(cdt)
            if fused:
                # cat(x1, xc) @ W_in == x1 @ W_in_x + xc @ W_in_c  (no concat)
                h = (jnp.dot(x1_c, w_in_x[l], preferred_element_type=jnp.float32)
                     + jnp.dot(xc_c, w_in_c[l], preferred_element_type=jnp.float32)
                     + b_in[l])
                h = _leaky_relu(h)
                for d in range(depth):
                    h = _leaky_relu(
                        jnp.dot(h.astype(cdt), w_hid[l * depth + d],
                                preferred_element_type=jnp.float32)
                        + b_hid[l * depth + d])
                h_c = h.astype(cdt)
                # Two full-width output dots -> s/t are whole tiles (no lane slice).
                s_pre = (jnp.dot(h_c, w_out_s[l], preferred_element_type=jnp.float32)
                         + b_out_s[l])
                t = (jnp.dot(h_c, w_out_t[l], preferred_element_type=jnp.float32)
                     + b_out_t[l])
            else:
                heads = []
                for g in range(2):              # g=0: s-net, g=1: t-net
                    gi = l * 2 + g
                    h = (jnp.dot(x1_c, w_in_x[gi], preferred_element_type=jnp.float32)
                         + jnp.dot(xc_c, w_in_c[gi], preferred_element_type=jnp.float32)
                         + b_in[gi])
                    h = _leaky_relu(h)
                    for d in range(depth):
                        h = _leaky_relu(
                            jnp.dot(h.astype(cdt), w_hid[gi * depth + d],
                                    preferred_element_type=jnp.float32)
                            + b_hid[gi * depth + d])
                    heads.append(
                        jnp.dot(h.astype(cdt), w_out[gi],
                                preferred_element_type=jnp.float32)
                        + b_out[gi])
                s_pre, t = heads

            s = jnp.tanh(s_pre)                 # f32
            # sum(s) (XLU) issued before exp(s) (EUP) so the pushes interleave.
            logdet = logdet + jnp.sum(s, axis=1, keepdims=True)
            x2 = x2 * jnp.exp(s) + t            # f32 affine update

            # PyTorch forward swaps halves before every odd coupling layer.
            if l + 1 < n_layers and (l + 1) % 2 == 1:
                x1, x2 = x2, x1

        # Single (bB, C) output slab (both halves), written once per grid step.
        out_ref[:, :half] = x1
        out_ref[:, half:] = x2
        ld_ref[...] = logdet

    return kernel


def pack_params(raw, *, fuse_st=None, compute_dtype=jnp.bfloat16, mxu_dim=256):
    """Pack the raw per-net Linear weights for the kernel.

    fuse_st=None -> auto: fuse the s/t nets into one 2H-wide MLP only if 2H
    fits one MXU tile (mxu_dim; 256 on v6e/v7x, use 128 for v5e).  Weights are
    stored in `compute_dtype` (bf16 halves resident VMEM + DMA bytes); biases
    stay f32.
    """
    w0, b0, wh, bh, wo, bo = raw
    L, _, Din, H = w0.shape
    depth = wh.shape[2]
    Ch = wo.shape[-1]
    wdt = compute_dtype
    f32 = jnp.float32
    if fuse_st is None:
        fuse_st = (2 * H <= mxu_dim)

    if fuse_st:
        # Input layer: concat along output dim (no wasted MACs), split x/xc part.
        w_in_x = jnp.concatenate([w0[:, 0, :Ch, :], w0[:, 1, :Ch, :]], -1).astype(wdt)  # (L,Ch,2H)
        w_in_c = jnp.concatenate([w0[:, 0, Ch:, :], w0[:, 1, Ch:, :]], -1).astype(wdt)  # (L,Cc,2H)
        b_in = jnp.concatenate([b0[:, 0], b0[:, 1]], -1)[:, None, :].astype(f32)        # (L,1,2H)
        # Hidden layers: block-diagonal (only when 2H <= MXU tile).
        zH = jnp.zeros((L, depth, H, H), w0.dtype)
        w_hid = jnp.concatenate(
            [jnp.concatenate([wh[:, 0], zH], -1),
             jnp.concatenate([zH, wh[:, 1]], -1)], -2)                                   # (L,depth,2H,2H)
        w_hid = w_hid.reshape(L * depth, 2 * H, 2 * H).astype(wdt)
        b_hid = jnp.concatenate([bh[:, 0], bh[:, 1]], -1)
        b_hid = b_hid.reshape(L * depth, 1, 2 * H).astype(f32)
        # Output heads: two full-width (2H, Ch) dots (zero half-rows each).
        zO = jnp.zeros((L, H, Ch), w0.dtype)
        w_out_s = jnp.concatenate([wo[:, 0], zO], -2).astype(wdt)                        # (L,2H,Ch)
        w_out_t = jnp.concatenate([zO, wo[:, 1]], -2).astype(wdt)                        # (L,2H,Ch)
        b_out_s = bo[:, 0][:, None, :].astype(f32)                                       # (L,1,Ch)
        b_out_t = bo[:, 1][:, None, :].astype(f32)
        params = (w_in_x, w_in_c, b_in, w_hid, b_hid,
                  w_out_s, w_out_t, b_out_s, b_out_t)
    else:
        # Separate s / t stacks, leading axis flattened to keep refs 3-D.
        Cc = Din - Ch
        w_in_x = w0[:, :, :Ch, :].reshape(L * 2, Ch, H).astype(wdt)
        w_in_c = w0[:, :, Ch:, :].reshape(L * 2, Cc, H).astype(wdt)
        b_in = b0.reshape(L * 2, 1, H).astype(f32)
        w_hid = wh.reshape(L * 2 * depth, H, H).astype(wdt)
        b_hid = bh.reshape(L * 2 * depth, 1, H).astype(f32)
        w_out = wo.reshape(L * 2, H, Ch).astype(wdt)
        b_out = bo.reshape(L * 2, 1, Ch).astype(f32)
        params = (w_in_x, w_in_c, b_in, w_hid, b_hid, w_out, b_out)

    return dict(fused=fuse_st, params=params, n_layers=L, depth=depth,
                half=Ch, hidden=H)


def coupling_forward(x, xc, packed, *, block_b=None):
    """Forward pass. x: (B, C, 1, 1), xc: (B, Cc, 1, 1).

    Returns (x_out (B, C, 1, 1), logdet (B,)) like the PyTorch module.
    """
    params = packed["params"]
    fused = packed["fused"]
    L, depth, half = packed["n_layers"], packed["depth"], packed["half"]
    B, C = x.shape[0], x.shape[1]
    Cc = xc.shape[1]
    assert C == 2 * half

    xf = x.reshape(B, C).astype(jnp.float32)
    xcf = xc.reshape(B, Cc).astype(jnp.float32)

    if block_b is None:
        block_b = _pick_block_b(B)
    Bp = _round_up(max(B, 1), block_b)
    if Bp != B:                                  # pad instead of asserting
        xf = jnp.pad(xf, ((0, Bp - B), (0, 0)))
        xcf = jnp.pad(xcf, ((0, Bp - B), (0, 0)))

    kernel = make_coupling_kernel(L, depth, half, fused, len(params))

    def act_spec(ncols):
        return pl.BlockSpec((block_b, ncols), lambda b: (b, 0))

    def weight_spec(arr):
        # Constant index map -> block stays resident across grid steps.
        # (For very large hidden_dim, pipeline_mode=pl.Buffered(1) here would
        #  additionally drop the second weight buffer on VMEM-tight chips.)
        nd = arr.ndim
        return pl.BlockSpec(arr.shape, lambda b, nd=nd: (0,) * nd)

    in_specs = [act_spec(C), act_spec(Cc)] + [weight_spec(p) for p in params]
    out_specs = [act_spec(C), act_spec(1)]

    # Cost estimate so XLA can overlap the call with surrounding graph ops.
    mat_idx = (0, 1, 3, 5, 6) if fused else (0, 1, 3, 5)
    macs = int(Bp) * int(sum(int(params[i].size) for i in mat_idx))
    param_bytes = int(sum(int(p.size) * p.dtype.itemsize for p in params))
    io_bytes = int((xf.size + xcf.size + Bp * (C + 1)) * 4)
    cost = pl.CostEstimate(flops=2 * macs,
                           transcendentals=2 * int(Bp) * L * half,
                           bytes_accessed=param_bytes + io_bytes)

    act_tile_bytes = block_b * (2 * C + Cc + 1) * 4
    vmem_limit = int(min(max(2 * param_bytes + 4 * act_tile_bytes + (4 << 20),
                             32 << 20), 64 << 20))

    out, ld = pl.pallas_call(
        kernel,
        out_shape=(jax.ShapeDtypeStruct((Bp, C), jnp.float32),
                   jax.ShapeDtypeStruct((Bp, 1), jnp.float32)),
        grid=(Bp // block_b,),
        in_specs=in_specs,
        out_specs=out_specs,
        compiler_params=pltpu.CompilerParams(
            dimension_semantics=("parallel",),
            vmem_limit_bytes=vmem_limit),
        cost_estimate=cost,
    )(xf, xcf, *params)

    x_out = out[:B].reshape(B, C, 1, 1)
    return x_out, ld[:B, 0]


def init_raw_params(key, in_channels, cond_channels, hidden_dim, depth):
    """Unfused synthetic parameters matching the module's Linear shapes.

    Net axis: index 0 == s-net (tanh head), index 1 == t-net.
    """
    Ch = in_channels // 2
    Din = Ch + cond_channels
    L = 2  # len(self.s) == len(self.t) == 2
    ks = jax.random.split(key, 6)
    sc = 0.1
    w0 = sc * jax.random.normal(ks[0], (L, 2, Din, hidden_dim), jnp.float32)
    b0 = sc * jax.random.normal(ks[1], (L, 2, hidden_dim), jnp.float32)
    wh = sc * jax.random.normal(ks[2], (L, 2, depth, hidden_dim, hidden_dim), jnp.float32)
    bh = sc * jax.random.normal(ks[3], (L, 2, depth, hidden_dim), jnp.float32)
    wo = sc * jax.random.normal(ks[4], (L, 2, hidden_dim, Ch), jnp.float32)
    bo = sc * jax.random.normal(ks[5], (L, 2, Ch), jnp.float32)
    return (w0, b0, wh, bh, wo, bo)


def coupling_reference(x, xc, raw):
    """Pure-JAX reference with the exact PyTorch forward semantics."""
    w0, b0, wh, bh, wo, bo = raw
    B, C = x.shape[0], x.shape[1]
    Ch = C // 2
    depth = wh.shape[2]
    xf = x.reshape(B, C)
    xcf = xc.reshape(B, xc.shape[1])
    logdet = jnp.zeros((B,), jnp.float32)
    for i in range(w0.shape[0]):
        if i % 2 != 0:
            xf = jnp.concatenate([xf[:, Ch:], xf[:, :Ch]], axis=1)
        x1, x2 = xf[:, :Ch], xf[:, Ch:]
        cond = jnp.concatenate([x1, xcf], axis=1)

        def net(which, use_tanh):
            h = _leaky_relu(cond @ w0[i, which] + b0[i, which])
            for d in range(depth):
                h = _leaky_relu(h @ wh[i, which, d] + bh[i, which, d])
            o = h @ wo[i, which] + bo[i, which]
            return jnp.tanh(o) if use_tanh else o

        s = net(0, True)
        t = net(1, False)
        x2n = x2 * jnp.exp(s) + t
        xf = jnp.concatenate([x1, x2n], axis=1)
        logdet = logdet + jnp.sum(s, axis=1)
    return xf.reshape(B, C, 1, 1), logdet


if __name__ == "__main__":
    B = 8          # batch
    C = 16         # in_channels
    CC = 8         # cond_channels
    HIDDEN = 32    # hidden_dim
    DEPTH = 2      # module default hidden depth

    key = jax.random.PRNGKey(0)
    kx, kc, kp = jax.random.split(key, 3)
    x = jax.random.normal(kx, (B, C, 1, 1), jnp.float32)
    xc = jax.random.normal(kc, (B, CC, 1, 1), jnp.float32)
    raw = init_raw_params(kp, C, CC, HIDDEN, DEPTH)

    x_ref, ld_ref = coupling_reference(x, xc, raw)
    x_ref = np.asarray(x_ref)
    ld_ref = np.asarray(ld_ref)

    # 1) Fused s/t MLP (2H <= MXU tile here), bf16 matmuls, f32 affine/logdet.
    packed = pack_params(raw, compute_dtype=jnp.bfloat16)
    assert packed["fused"]
    x_out, logdet = coupling_forward(x, xc, packed)
    jax.block_until_ready((x_out, logdet))
    np.testing.assert_allclose(np.asarray(x_out), x_ref, rtol=3e-2, atol=3e-2)
    np.testing.assert_allclose(np.asarray(logdet), ld_ref, rtol=3e-2, atol=3e-2)

    # 2) Split s/t path (what a large hidden_dim would select) in f32, with a
    #    batch that is not a multiple of 8 to exercise the padding path.
    packed_split = pack_params(raw, fuse_st=False, compute_dtype=jnp.float32)
    B2 = 6
    x_out2, logdet2 = coupling_forward(x[:B2], xc[:B2], packed_split)
    jax.block_until_ready((x_out2, logdet2))
    np.testing.assert_allclose(np.asarray(x_out2), x_ref[:B2], rtol=1e-2, atol=1e-2)
    np.testing.assert_allclose(np.asarray(logdet2), ld_ref[:B2], rtol=1e-2, atol=1e-2)

    print("KERNEL_OK")
</pallas_src>

<mosaic_0001>
module attributes {stable_mosaic.version = 11 : i64} {
  func.func @kernel(%arg0: i32, %arg1: memref<8x16xf32, #tpu.memory_space<vmem>>, %arg2: memref<8x8xf32, #tpu.memory_space<vmem>>, %arg3: memref<2x8x64xbf16, #tpu.memory_space<vmem>>, %arg4: memref<2x8x64xbf16, #tpu.memory_space<vmem>>, %arg5: memref<2x1x64xf32, #tpu.memory_space<vmem>>, %arg6: memref<4x64x64xbf16, #tpu.memory_space<vmem>>, %arg7: memref<4x1x64xf32, #tpu.memory_space<vmem>>, %arg8: memref<2x64x8xbf16, #tpu.memory_space<vmem>>, %arg9: memref<2x64x8xbf16, #tpu.memory_space<vmem>>, %arg10: memref<2x1x8xf32, #tpu.memory_space<vmem>>, %arg11: memref<2x1x8xf32, #tpu.memory_space<vmem>>, %arg12: memref<8x16xf32, #tpu.memory_space<vmem>>, %arg13: memref<8x1xf32, #tpu.memory_space<vmem>>) attributes {dimension_semantics = [#tpu.dimension_semantics<parallel>], iteration_bounds = array<i64: 1>, scalar_prefetch = 0 : i64, scratch_operands = 0 : i64, tpu.core_type = #tpu.core_type<tc>, window_params = [{transform_indices = @transform_0, window_bounds = array<i64: 8, 16>}, {transform_indices = @transform_1, window_bounds = array<i64: 8, 8>}, {pipeline_mode = #tpu.pipeline_mode<synchronous>, transform_indices = @transform_2, window_bounds = array<i64: 2, 8, 64>}, {pipeline_mode = #tpu.pipeline_mode<synchronous>, transform_indices = @transform_3, window_bounds = array<i64: 2, 8, 64>}, {pipeline_mode = #tpu.pipeline_mode<synchronous>, transform_indices = @transform_4, window_bounds = array<i64: 2, 1, 64>}, {pipeline_mode = #tpu.pipeline_mode<synchronous>, transform_indices = @transform_5, window_bounds = array<i64: 4, 64, 64>}, {pipeline_mode = #tpu.pipeline_mode<synchronous>, transform_indices = @transform_6, window_bounds = array<i64: 4, 1, 64>}, {pipeline_mode = #tpu.pipeline_mode<synchronous>, transform_indices = @transform_7, window_bounds = array<i64: 2, 64, 8>}, {pipeline_mode = #tpu.pipeline_mode<synchronous>, transform_indices = @transform_8, window_bounds = array<i64: 2, 64, 8>}, {pipeline_mode = #tpu.pipeline_mode<synchronous>, transform_indices = @transform_9, window_bounds = array<i64: 2, 1, 8>}, {pipeline_mode = #tpu.pipeline_mode<synchronous>, transform_indices = @transform_10, window_bounds = array<i64: 2, 1, 8>}, {transform_indices = @transform_11, window_bounds = array<i64: 8, 16>}, {transform_indices = @transform_12, window_bounds = array<i64: 8, 1>}]} {
    %c0 = arith.constant 0 : index
    %c0_0 = arith.constant 0 : index
    %0 = vector.load %arg1[%c0, %c0_0] : memref<8x16xf32, #tpu.memory_space<vmem>>, vector<8x16xf32>
    %1 = vector.extract_strided_slice %0 {offsets = [0, 0], sizes = [8, 8], strides = [1, 1]} : vector<8x16xf32> to vector<8x8xf32>
    %2 = vector.extract_strided_slice %0 {offsets = [0, 8], sizes = [8, 8], strides = [1, 1]} : vector<8x16xf32> to vector<8x8xf32>
    %c0_1 = arith.constant 0 : index
    %c0_2 = arith.constant 0 : index
    %3 = vector.load %arg2[%c0_1, %c0_2] : memref<8x8xf32, #tpu.memory_space<vmem>>, vector<8x8xf32>
    %4 = arith.truncf %3 : vector<8x8xf32> to vector<8x8xbf16>
    %cst = arith.constant 0.000000e+00 : f32
    %5 = vector.broadcast %cst : f32 to vector<8x1xf32>
    %6 = arith.truncf %1 : vector<8x8xf32> to vector<8x8xbf16>
    %c0_3 = arith.constant 0 : index
    %c0_4 = arith.constant 0 : index
    %c0_5 = arith.constant 0 : index
    %7 = vector.load %arg3[%c0_3, %c0_4, %c0_5] : memref<2x8x64xbf16, #tpu.memory_space<vmem>>, vector<1x8x64xbf16>
    %8 = vector.shape_cast %7 : vector<1x8x64xbf16> to vector<8x64xbf16>
    %cst_6 = arith.constant dense<0.000000e+00> : vector<8x64xf32>
    %9 = tpu.matmul %6, %8, %cst_6 {dimension_numbers = #tpu.dot_dimension_numbers<[1], [0], [0], [1], [0, 0, 1, 1], [], []>} : vector<8x8xbf16>, vector<8x64xbf16>, vector<8x64xf32> -> vector<8x64xf32>
    %c0_7 = arith.constant 0 : index
    %c0_8 = arith.constant 0 : index
    %c0_9 = arith.constant 0 : index
    %10 = vector.load %arg4[%c0_7, %c0_8, %c0_9] : memref<2x8x64xbf16, #tpu.memory_space<vmem>>, vector<1x8x64xbf16>
    %11 = vector.shape_cast %10 : vector<1x8x64xbf16> to vector<8x64xbf16>
    %cst_10 = arith.constant dense<0.000000e+00> : vector<8x64xf32>
    %12 = tpu.matmul %4, %11, %cst_10 {dimension_numbers = #tpu.dot_dimension_numbers<[1], [0], [0], [1], [0, 0, 1, 1], [], []>} : vector<8x8xbf16>, vector<8x64xbf16>, vector<8x64xf32> -> vector<8x64xf32>
    %13 = arith.addf %9, %12 : vector<8x64xf32>
    %c0_11 = arith.constant 0 : index
    %c0_12 = arith.constant 0 : index
    %c0_13 = arith.constant 0 : index
    %14 = vector.load %arg5[%c0_11, %c0_12, %c0_13] : memref<2x1x64xf32, #tpu.memory_space<vmem>>, vector<1x1x64xf32>
    %15 = vector.shape_cast %14 : vector<1x1x64xf32> to vector<1x64xf32>
    %16 = vector.broadcast %15 : vector<1x64xf32> to vector<8x64xf32>
    %17 = arith.addf %13, %16 : vector<8x64xf32>
    %cst_14 = arith.constant 0.000000e+00 : f32
    %18 = vector.broadcast %cst_14 : f32 to vector<8x64xf32>
    %19 = arith.cmpf ogt, %17, %18 : vector<8x64xf32>
    %cst_15 = arith.constant 0.00999999977 : f32
    %20 = vector.broadcast %cst_15 : f32 to vector<8x64xf32>
    %21 = arith.mulf %20, %17 : vector<8x64xf32>
    %22 = arith.select %19, %17, %21 : vector<8x64xi1>, vector<8x64xf32>
    %23 = arith.truncf %22 : vector<8x64xf32> to vector<8x64xbf16>
    %c0_16 = arith.constant 0 : index
    %c0_17 = arith.constant 0 : index
    %c0_18 = arith.constant 0 : index
    %24 = vector.load %arg6[%c0_16, %c0_17, %c0_18] : memref<4x64x64xbf16, #tpu.memory_space<vmem>>, vector<1x64x64xbf16>
    %25 = vector.shape_cast %24 : vector<1x64x64xbf16> to vector<64x64xbf16>
    %cst_19 = arith.constant dense<0.000000e+00> : vector<8x64xf32>
    %26 = tpu.matmul %23, %25, %cst_19 {dimension_numbers = #tpu.dot_dimension_numbers<[1], [0], [0], [1], [0, 0, 1, 1], [], []>} : vector<8x64xbf16>, vector<64x64xbf16>, vector<8x64xf32> -> vector<8x64xf32>
    %c0_20 = arith.constant 0 : index
    %c0_21 = arith.constant 0 : index
    %c0_22 = arith.constant 0 : index
    %27 = vector.load %arg7[%c0_20, %c0_21, %c0_22] : memref<4x1x64xf32, #tpu.memory_space<vmem>>, vector<1x1x64xf32>
    %28 = vector.shape_cast %27 : vector<1x1x64xf32> to vector<1x64xf32>
    %29 = vector.broadcast %28 : vector<1x64xf32> to vector<8x64xf32>
    %30 = arith.addf %26, %29 : vector<8x64xf32>
    %cst_23 = arith.constant 0.000000e+00 : f32
    %31 = vector.broadcast %cst_23 : f32 to vector<8x64xf32>
    %32 = arith.cmpf ogt, %30, %31 : vector<8x64xf32>
    %cst_24 = arith.constant 0.00999999977 : f32
    %33 = vector.broadcast %cst_24 : f32 to vector<8x64xf32>
    %34 = arith.mulf %33, %30 : vector<8x64xf32>
    %35 = arith.select %32, %30, %34 : vector<8x64xi1>, vector<8x64xf32>
    %36 = arith.truncf %35 : vector<8x64xf32> to vector<8x64xbf16>
    %c1 = arith.constant 1 : index
    %c0_25 = arith.constant 0 : index
    %c0_26 = arith.constant 0 : index
    %37 = vector.load %arg6[%c1, %c0_25, %c0_26] : memref<4x64x64xbf16, #tpu.memory_space<vmem>>, vector<1x64x64xbf16>
    %38 = vector.shape_cast %37 : vector<1x64x64xbf16> to vector<64x64xbf16>
    %cst_27 = arith.constant dense<0.000000e+00> : vector<8x64xf32>
    %39 = tpu.matmul %36, %38, %cst_27 {dimension_numbers = #tpu.dot_dimension_numbers<[1], [0], [0], [1], [0, 0, 1, 1], [], []>} : vector<8x64xbf16>, vector<64x64xbf16>, vector<8x64xf32> -> vector<8x64xf32>
    %c1_28 = arith.constant 1 : index
    %c0_29 = arith.constant 0 : index
    %c0_30 = arith.constant 0 : index
    %40 = vector.load %arg7[%c1_28, %c0_29, %c0_30] : memref<4x1x64xf32, #tpu.memory_space<vmem>>, vector<1x1x64xf32>
    %41 = vector.shape_cast %40 : vector<1x1x64xf32> to vector<1x64xf32>
    %42 = vector.broadcast %41 : vector<1x64xf32> to vector<8x64xf32>
    %43 = arith.addf %39, %42 : vector<8x64xf32>
    %cst_31 = arith.constant 0.000000e+00 : f32
    %44 = vector.broadcast %cst_31 : f32 to vector<8x64xf32>
    %45 = arith.cmpf ogt, %43, %44 : vector<8x64xf32>
    %cst_32 = arith.constant 0.00999999977 : f32
    %46 = vector.broadcast %cst_32 : f32 to vector<8x64xf32>
    %47 = arith.mulf %46, %43 : vector<8x64xf32>
    %48 = arith.select %45, %43, %47 : vector<8x64xi1>, vector<8x64xf32>
    %49 = arith.truncf %48 : vector<8x64xf32> to vector<8x64xbf16>
    %c0_33 = arith.constant 0 : index
    %c0_34 = arith.constant 0 : index
    %c0_35 = arith.constant 0 : index
    %50 = vector.load %arg8[%c0_33, %c0_34, %c0_35] : memref<2x64x8xbf16, #tpu.memory_space<vmem>>, vector<1x64x8xbf16>
    %51 = vector.shape_cast %50 : vector<1x64x8xbf16> to vector<64x8xbf16>
    %cst_36 = arith.constant dense<0.000000e+00> : vector<8x8xf32>
    %52 = tpu.matmul %49, %51, %cst_36 {dimension_numbers = #tpu.dot_dimension_numbers<[1], [0], [0], [1], [0, 0, 1, 1], [], []>} : vector<8x64xbf16>, vector<64x8xbf16>, vector<8x8xf32> -> vector<8x8xf32>
    %c0_37 = arith.constant 0 : index
    %c0_38 = arith.constant 0 : index
    %c0_39 = arith.constant 0 : index
    %53 = vector.load %arg10[%c0_37, %c0_38, %c0_39] : memref<2x1x8xf32, #tpu.memory_space<vmem>>, vector<1x1x8xf32>
    %54 = vector.shape_cast %53 : vector<1x1x8xf32> to vector<1x8xf32>
    %55 = vector.broadcast %54 : vector<1x8xf32> to vector<8x8xf32>
    %56 = arith.addf %52, %55 : vector<8x8xf32>
    %c0_40 = arith.constant 0 : index
    %c0_41 = arith.constant 0 : index
    %c0_42 = arith.constant 0 : index
    %57 = vector.load %arg9[%c0_40, %c0_41, %c0_42] : memref<2x64x8xbf16, #tpu.memory_space<vmem>>, vector<1x64x8xbf16>
    %58 = vector.shape_cast %57 : vector<1x64x8xbf16> to vector<64x8xbf16>
    %cst_43 = arith.constant dense<0.000000e+00> : vector<8x8xf32>
    %59 = tpu.matmul %49, %58, %cst_43 {dimension_numbers = #tpu.dot_dimension_numbers<[1], [0], [0], [1], [0, 0, 1, 1], [], []>} : vector<8x64xbf16>, vector<64x8xbf16>, vector<8x8xf32> -> vector<8x8xf32>
    %c0_44 = arith.constant 0 : index
    %c0_45 = arith.constant 0 : index
    %c0_46 = arith.constant 0 : index
    %60 = vector.load %arg11[%c0_44, %c0_45, %c0_46] : memref<2x1x8xf32, #tpu.memory_space<vmem>>, vector<1x1x8xf32>
    %61 = vector.shape_cast %60 : vector<1x1x8xf32> to vector<1x8xf32>
    %62 = vector.broadcast %61 : vector<1x8xf32> to vector<8x8xf32>
    %63 = arith.addf %59, %62 : vector<8x8xf32>
    %64 = math.tanh %56 : vector<8x8xf32>
    %cst_47 = arith.constant dense<0.000000e+00> : vector<8xf32>
    %65 = vector.multi_reduction <add>, %64, %cst_47 [1] : vector<8x8xf32> to vector<8xf32>
    %66 = vector.shape_cast %65 : vector<8xf32> to vector<8x1xf32>
    %67 = arith.addf %5, %66 : vector<8x1xf32>
    %68 = math.exp %64 : vector<8x8xf32>
    %69 = arith.mulf %2, %68 : vector<8x8xf32>
    %70 = arith.addf %69, %63 : vector<8x8xf32>
    %71 = arith.truncf %70 : vector<8x8xf32> to vector<8x8xbf16>
    %c1_48 = arith.constant 1 : index
    %c0_49 = arith.constant 0 : index
    %c0_50 = arith.constant 0 : index
    %72 = vector.load %arg3[%c1_48, %c0_49, %c0_50] : memref<2x8x64xbf16, #tpu.memory_space<vmem>>, vector<1x8x64xbf16>
    %73 = vector.shape_cast %72 : vector<1x8x64xbf16> to vector<8x64xbf16>
    %cst_51 = arith.constant dense<0.000000e+00> : vector<8x64xf32>
    %74 = tpu.matmul %71, %73, %cst_51 {dimension_numbers = #tpu.dot_dimension_numbers<[1], [0], [0], [1], [0, 0, 1, 1], [], []>} : vector<8x8xbf16>, vector<8x64xbf16>, vector<8x64xf32> -> vector<8x64xf32>
    %c1_52 = arith.constant 1 : index
    %c0_53 = arith.constant 0 : index
    %c0_54 = arith.constant 0 : index
    %75 = vector.load %arg4[%c1_52, %c0_53, %c0_54] : memref<2x8x64xbf16, #tpu.memory_space<vmem>>, vector<1x8x64xbf16>
    %76 = vector.shape_cast %75 : vector<1x8x64xbf16> to vector<8x64xbf16>
    %cst_55 = arith.constant dense<0.000000e+00> : vector<8x64xf32>
    %77 = tpu.matmul %4, %76, %cst_55 {dimension_numbers = #tpu.dot_dimension_numbers<[1], [0], [0], [1], [0, 0, 1, 1], [], []>} : vector<8x8xbf16>, vector<8x64xbf16>, vector<8x64xf32> -> vector<8x64xf32>
    %78 = arith.addf %74, %77 : vector<8x64xf32>
    %c1_56 = arith.constant 1 : index
    %c0_57 = arith.constant 0 : index
    %c0_58 = arith.constant 0 : index
    %79 = vector.load %arg5[%c1_56, %c0_57, %c0_58] : memref<2x1x64xf32, #tpu.memory_space<vmem>>, vector<1x1x64xf32>
    %80 = vector.shape_cast %79 : vector<1x1x64xf32> to vector<1x64xf32>
    %81 = vector.broadcast %80 : vector<1x64xf32> to vector<8x64xf32>
    %82 = arith.addf %78, %81 : vector<8x64xf32>
    %cst_59 = arith.constant 0.000000e+00 : f32
    %83 = vector.broadcast %cst_59 : f32 to vector<8x64xf32>
    %84 = arith.cmpf ogt, %82, %83 : vector<8x64xf32>
    %cst_60 = arith.constant 0.00999999977 : f32
    %85 = vector.broadcast %cst_60 : f32 to vector<8x64xf32>
    %86 = arith.mulf %85, %82 : vector<8x64xf32>
    %87 = arith.select %84, %82, %86 : vector<8x64xi1>, vector<8x64xf32>
    %88 = arith.truncf %87 : vector<8x64xf32> to vector<8x64xbf16>
    %c2 = arith.constant 2 : index
    %c0_61 = arith.constant 0 : index
    %c0_62 = arith.constant 0 : index
    %89 = vector.load %arg6[%c2, %c0_61, %c0_62] : memref<4x64x64xbf16, #tpu.memory_space<vmem>>, vector<1x64x64xbf16>
    %90 = vector.shape_cast %89 : vector<1x64x64xbf16> to vector<64x64xbf16>
    %cst_63 = arith.constant dense<0.000000e+00> : vector<8x64xf32>
    %91 = tpu.matmul %88, %90, %cst_63 {dimension_numbers = #tpu.dot_dimension_numbers<[1], [0], [0], [1], [0, 0, 1, 1], [], []>} : vector<8x64xbf16>, vector<64x64xbf16>, vector<8x64xf32> -> vector<8x64xf32>
    %c2_64 = arith.constant 2 : index
    %c0_65 = arith.constant 0 : index
    %c0_66 = arith.constant 0 : index
    %92 = vector.load %arg7[%c2_64, %c0_65, %c0_66] : memref<4x1x64xf32, #tpu.memory_space<vmem>>, vector<1x1x64xf32>
    %93 = vector.shape_cast %92 : vector<1x1x64xf32> to vector<1x64xf32>
    %94 = vector.broadcast %93 : vector<1x64xf32> to vector<8x64xf32>
    %95 = arith.addf %91, %94 : vector<8x64xf32>
    %cst_67 = arith.constant 0.000000e+00 : f32
    %96 = vector.broadcast %cst_67 : f32 to vector<8x64xf32>
    %97 = arith.cmpf ogt, %95, %96 : vector<8x64xf32>
    %cst_68 = arith.constant 0.00999999977 : f32
    %98 = vector.broadcast %cst_68 : f32 to vector<8x64xf32>
    %99 = arith.mulf %98, %95 : vector<8x64xf32>
    %100 = arith.select %97, %95, %99 : vector<8x64xi1>, vector<8x64xf32>
    %101 = arith.truncf %100 : vector<8x64xf32> to vector<8x64xbf16>
    %c3 = arith.constant 3 : index
    %c0_69 = arith.constant 0 : index
    %c0_70 = arith.constant 0 : index
    %102 = vector.load %arg6[%c3, %c0_69, %c0_70] : memref<4x64x64xbf16, #tpu.memory_space<vmem>>, vector<1x64x64xbf16>
    %103 = vector.shape_cast %102 : vector<1x64x64xbf16> to vector<64x64xbf16>
    %cst_71 = arith.constant dense<0.000000e+00> : vector<8x64xf32>
    %104 = tpu.matmul %101, %103, %cst_71 {dimension_numbers = #tpu.dot_dimension_numbers<[1], [0], [0], [1], [0, 0, 1, 1], [], []>} : vector<8x64xbf16>, vector<64x64xbf16>, vector<8x64xf32> -> vector<8x64xf32>
    %c3_72 = arith.constant 3 : index
    %c0_73 = arith.constant 0 : index
    %c0_74 = arith.constant 0 : index
    %105 = vector.load %arg7[%c3_72, %c0_73, %c0_74] : memref<4x1x64xf32, #tpu.memory_space<vmem>>, vector<1x1x64xf32>
    %106 = vector.shape_cast %105 : vector<1x1x64xf32> to vector<1x64xf32>
    %107 = vector.broadcast %106 : vector<1x64xf32> to vector<8x64xf32>
    %108 = arith.addf %104, %107 : vector<8x64xf32>
    %cst_75 = arith.constant 0.000000e+00 : f32
    %109 = vector.broadcast %cst_75 : f32 to vector<8x64xf32>
    %110 = arith.cmpf ogt, %108, %109 : vector<8x64xf32>
    %cst_76 = arith.constant 0.00999999977 : f32
    %111 = vector.broadcast %cst_76 : f32 to vector<8x64xf32>
    %112 = arith.mulf %111, %108 : vector<8x64xf32>
    %113 = arith.select %110, %108, %112 : vector<8x64xi1>, vector<8x64xf32>
    %114 = arith.truncf %113 : vector<8x64xf32> to vector<8x64xbf16>
    %c1_77 = arith.constant 1 : index
    %c0_78 = arith.constant 0 : index
    %c0_79 = arith.constant 0 : index
    %115 = vector.load %arg8[%c1_77, %c0_78, %c0_79] : memref<2x64x8xbf16, #tpu.memory_space<vmem>>, vector<1x64x8xbf16>
    %116 = vector.shape_cast %115 : vector<1x64x8xbf16> to vector<64x8xbf16>
    %cst_80 = arith.constant dense<0.000000e+00> : vector<8x8xf32>
    %117 = tpu.matmul %114, %116, %cst_80 {dimension_numbers = #tpu.dot_dimension_numbers<[1], [0], [0], [1], [0, 0, 1, 1], [], []>} : vector<8x64xbf16>, vector<64x8xbf16>, vector<8x8xf32> -> vector<8x8xf32>
    %c1_81 = arith.constant 1 : index
    %c0_82 = arith.constant 0 : index
    %c0_83 = arith.constant 0 : index
    %118 = vector.load %arg10[%c1_81, %c0_82, %c0_83] : memref<2x1x8xf32, #tpu.memory_space<vmem>>, vector<1x1x8xf32>
    %119 = vector.shape_cast %118 : vector<1x1x8xf32> to vector<1x8xf32>
    %120 = vector.broadcast %119 : vector<1x8xf32> to vector<8x8xf32>
    %121 = arith.addf %117, %120 : vector<8x8xf32>
    %c1_84 = arith.constant 1 : index
    %c0_85 = arith.constant 0 : index
    %c0_86 = arith.constant 0 : index
    %122 = vector.load %arg9[%c1_84, %c0_85, %c0_86] : memref<2x64x8xbf16, #tpu.memory_space<vmem>>, vector<1x64x8xbf16>
    %123 = vector.shape_cast %122 : vector<1x64x8xbf16> to vector<64x8xbf16>
    %cst_87 = arith.constant dense<0.000000e+00> : vector<8x8xf32>
    %124 = tpu.matmul %114, %123, %cst_87 {dimension_numbers = #tpu.dot_dimension_numbers<[1], [0], [0], [1], [0, 0, 1, 1], [], []>} : vector<8x64xbf16>, vector<64x8xbf16>, vector<8x8xf32> -> vector<8x8xf32>
    %c1_88 = arith.constant 1 : index
    %c0_89 = arith.constant 0 : index
    %c0_90 = arith.constant 0 : index
    %125 = vector.load %arg11[%c1_88, %c0_89, %c0_90] : memref<2x1x8xf32, #tpu.memory_space<vmem>>, vector<1x1x8xf32>
    %126 = vector.shape_cast %125 : vector<1x1x8xf32> to vector<1x8xf32>
    %127 = vector.broadcast %126 : vector<1x8xf32> to vector<8x8xf32>
    %128 = arith.addf %124, %127 : vector<8x8xf32>
    %129 = math.tanh %121 : vector<8x8xf32>
    %cst_91 = arith.constant dense<0.000000e+00> : vector<8xf32>
    %130 = vector.multi_reduction <add>, %129, %cst_91 [1] : vector<8x8xf32> to vector<8xf32>
    %131 = vector.shape_cast %130 : vector<8xf32> to vector<8x1xf32>
    %132 = arith.addf %67, %131 : vector<8x1xf32>
    %133 = math.exp %129 : vector<8x8xf32>
    %134 = arith.mulf %1, %133 : vector<8x8xf32>
    %135 = arith.addf %134, %128 : vector<8x8xf32>
    %c0_92 = arith.constant 0 : index
    %c0_93 = arith.constant 0 : index
    %136 = vector.load %arg12[%c0_92, %c0_93] : memref<8x16xf32, #tpu.memory_space<vmem>>, vector<8x8xf32>
    tpu.vector_store %arg12[%c0_92, %c0_93], %70 {strides = array<i32>} : memref<8x16xf32, #tpu.memory_space<vmem>>, vector<8x8xf32>,
    %c0_94 = arith.constant 0 : index
    %c8 = arith.constant 8 : index
    %137 = vector.load %arg12[%c0_94, %c8] : memref<8x16xf32, #tpu.memory_space<vmem>>, vector<8x8xf32>
    tpu.vector_store %arg12[%c0_94, %c8], %135 {strides = array<i32>} : memref<8x16xf32, #tpu.memory_space<vmem>>, vector<8x8xf32>,
    %c0_95 = arith.constant 0 : index
    %c0_96 = arith.constant 0 : index
    %138 = vector.load %arg13[%c0_95, %c0_96] : memref<8x1xf32, #tpu.memory_space<vmem>>, vector<8x1xf32>
    tpu.vector_store %arg13[%c0_95, %c0_96], %132 {strides = array<i32>} : memref<8x1xf32, #tpu.memory_space<vmem>>, vector<8x1xf32>,
    return
  }
  func.func @transform_0(%arg0: i32) -> (i32, i32) {
    %c0_i32 = arith.constant 0 : i32
    %c0_i32_0 = arith.constant 0 : i32
    return %arg0, %c0_i32 : i32, i32
  }
  func.func @transform_1(%arg0: i32) -> (i32, i32) {
    %c0_i32 = arith.constant 0 : i32
    %c0_i32_0 = arith.constant 0 : i32
    return %arg0, %c0_i32 : i32, i32
  }
  func.func @transform_2(%arg0: i32) -> (i32, i32, i32) {
    %c0_i32 = arith.constant 0 : i32
    %c0_i32_0 = arith.constant 0 : i32
    %c0_i32_1 = arith.constant 0 : i32
    %c0_i32_2 = arith.constant 0 : i32
    return %c0_i32, %c0_i32_0, %c0_i32_1 : i32, i32, i32
  }
  func.func @transform_3(%arg0: i32) -> (i32, i32, i32) {
    %c0_i32 = arith.constant 0 : i32
    %c0_i32_0 = arith.constant 0 : i32
    %c0_i32_1 = arith.constant 0 : i32
    %c0_i32_2 = arith.constant 0 : i32
    return %c0_i32, %c0_i32_0, %c0_i32_1 : i32, i32, i32
  }
  func.func @transform_4(%arg0: i32) -> (i32, i32, i32) {
    %c0_i32 = arith.constant 0 : i32
    %c0_i32_0 = arith.constant 0 : i32
    %c0_i32_1 = arith.constant 0 : i32
    %c0_i32_2 = arith.constant 0 : i32
    return %c0_i32, %c0_i32_0, %c0_i32_1 : i32, i32, i32
  }
  func.func @transform_5(%arg0: i32) -> (i32, i32, i32) {
    %c0_i32 = arith.constant 0 : i32
    %c0_i32_0 = arith.constant 0 : i32
    %c0_i32_1 = arith.constant 0 : i32
    %c0_i32_2 = arith.constant 0 : i32
    return %c0_i32, %c0_i32_0, %c0_i32_1 : i32, i32, i32
  }
  func.func @transform_6(%arg0: i32) -> (i32, i32, i32) {
    %c0_i32 = arith.constant 0 : i32
    %c0_i32_0 = arith.constant 0 : i32
    %c0_i32_1 = arith.constant 0 : i32
    %c0_i32_2 = arith.constant 0 : i32
    return %c0_i32, %c0_i32_0, %c0_i32_1 : i32, i32, i32
  }
  func.func @transform_7(%arg0: i32) -> (i32, i32, i32) {
    %c0_i32 = arith.constant 0 : i32
    %c0_i32_0 = arith.constant 0 : i32
    %c0_i32_1 = arith.constant 0 : i32
    %c0_i32_2 = arith.constant 0 : i32
    return %c0_i32, %c0_i32_0, %c0_i32_1 : i32, i32, i32
  }
  func.func @transform_8(%arg0: i32) -> (i32, i32, i32) {
    %c0_i32 = arith.constant 0 : i32
    %c0_i32_0 = arith.constant 0 : i32
    %c0_i32_1 = arith.constant 0 : i32
    %c0_i32_2 = arith.constant 0 : i32
    return %c0_i32, %c0_i32_0, %c0_i32_1 : i32, i32, i32
  }
  func.func @transform_9(%arg0: i32) -> (i32, i32, i32) {
    %c0_i32 = arith.constant 0 : i32
    %c0_i32_0 = arith.constant 0 : i32
    %c0_i32_1 = arith.constant 0 : i32
    %c0_i32_2 = arith.constant 0 : i32
    return %c0_i32, %c0_i32_0, %c0_i32_1 : i32, i32, i32
  }
  func.func @transform_10(%arg0: i32) -> (i32, i32, i32) {
    %c0_i32 = arith.constant 0 : i32
    %c0_i32_0 = arith.constant 0 : i32
    %c0_i32_1 = arith.constant 0 : i32
    %c0_i32_2 = arith.constant 0 : i32
    return %c0_i32, %c0_i32_0, %c0_i32_1 : i32, i32, i32
  }
  func.func @transform_11(%arg0: i32) -> (i32, i32) {
    %c0_i32 = arith.constant 0 : i32
    %c0_i32_0 = arith.constant 0 : i32
    return %arg0, %c0_i32 : i32, i32
  }
  func.func @transform_12(%arg0: i32) -> (i32, i32) {
    %c0_i32 = arith.constant 0 : i32
    %c0_i32_0 = arith.constant 0 : i32
    return %arg0, %c0_i32 : i32, i32
  }
}

</mosaic_0001>

<llo_original>
// kernel: tpu_custom_call.1
$region0: #{tpu_custom_call.1}
  #allocation0 [shape = 'u32[]', space=smem, size = 0x4, offset = 0x4, fixed_abs, tag = 'smem constant byte address 0x4 - core index']
  #allocation1 [shape = 'u32[72,128]{1,0:T(1,128)}', space=vmem, size = 0x9000, scoped, tag = 'internal scratch']
  %s0 = inlined_call_operand.vmem [shape: f32[8,16], index: 0, kind: input, shape index: {}]
  %s1 = inlined_call_operand.hbm [shape: f32[8,8], index: 1, kind: input, shape index: {}]
  %s2 = inlined_call_operand.hbm [shape: bf16[2,8,64], index: 2, kind: input, shape index: {}]
  %s3 = inlined_call_operand.hbm [shape: bf16[2,8,64], index: 3, kind: input, shape index: {}]
  %s4 = inlined_call_operand.hbm [shape: f32[2,1,64], index: 4, kind: input, shape index: {}]
  %s5 = inlined_call_operand.vmem [shape: bf16[4,64,64], index: 5, kind: input, shape index: {}]
  %s6 = inlined_call_operand.vmem [shape: f32[4,1,64], index: 6, kind: input, shape index: {}]
  %s7 = inlined_call_operand.vmem [shape: bf16[2,64,8], index: 7, kind: input, shape index: {}]
  %s8 = inlined_call_operand.vmem [shape: bf16[2,64,8], index: 8, kind: input, shape index: {}]
  %s9 = inlined_call_operand.vmem [shape: f32[2,1,8], index: 9, kind: input, shape index: {}]
  %s10 = inlined_call_operand.vmem [shape: f32[2,1,8], index: 10, kind: input, shape index: {}]
  %s11 = inlined_call_operand.hbm [shape: f32[8,16], index: 11, kind: output, shape index: {0}]
  %s12 = inlined_call_operand.vmem [shape: f32[8,1], index: 12, kind: output, shape index: {1}]
  %13 = xla_tuple %s11, %s12
  %s14 = sld [smem:[#allocation0]]
  $region78: #{tpu_custom_call.1} parent=0
    _
  %s16 = ssub.s32 1, %s14
  %s17 = scalar_select 0, %s16, %s14
  $region1: #{tpu_custom_call.1} parent=0
    #allocation2 [shape = 'u8[4096]{0}', space=vmem, size = 0x1000, scoped, tag = 'input window, operand 1, single buffered']
    #allocation3 [shape = 's32[1]{0}', space=sflag, size = 0x4, scoped, tag = 'scoped memory for tpu_custom_call.1']
    #allocation4 [shape = 's32[1]{0}', space=sflag, size = 0x4, scoped, tag = 'scoped memory for tpu_custom_call.1']
    #allocation5 [shape = 'u8[4096]{0}', space=vmem, size = 0x1000, scoped, tag = 'input window, operand 2, single buffered']
    #allocation6 [shape = 's32[1]{0}', space=sflag, size = 0x4, scoped, tag = 'scoped memory for tpu_custom_call.1']
    #allocation7 [shape = 'u8[4096]{0}', space=vmem, size = 0x1000, scoped, tag = 'input window, operand 3, single buffered']
    #allocation8 [shape = 'u8[1024]{0}', space=vmem, size = 0x400, scoped, tag = 'input window, operand 4, single buffered']
    #allocation9 [shape = 's32[1]{0}', space=sflag, size = 0x4, scoped, tag = 'scoped memory for tpu_custom_call.1']
    #allocation10 [shape = 'u8[4096]{0}', space=vmem, size = 0x1000, scoped, tag = 'output window, operand 0, single buffered']
    %18 = vsyncpa [#allocation3], 0
    %19 = vsyncpa [#allocation6], 0
    %20 = vsyncpa [#allocation9], 0
    %21 = vsyncpa [#allocation4], 0
    // Predicated region
    $region2: #{tpu_custom_call.1} parent=1 // pred_check
      _
    $region3: #{tpu_custom_call.1} parent=1 // pred_check_branch
      %23 = sbr.rel (0) target = $region5
    $region4: #{tpu_custom_call.1} parent=1 // pred_region
      _
    $region5: #{tpu_custom_call.1} parent=1 // pred_fallthru
      _
    // Predicated region
    $region6: #{tpu_custom_call.1} parent=1 // pred_check
      _
    $region7: #{tpu_custom_call.1} parent=1 // pred_check_branch
      %25 = sbr.rel (0) target = $region9
    $region8: #{tpu_custom_call.1} parent=1 // pred_region
      %27 = vsyncadd [#allocation3], 0
      %s29 = sshll.u32 %s1, 4
      %s30 = int_to_ptr.hbm [resolvable:$true] %s29
      %s31 = sshll.u32 [#allocation2], 4
      %s32 = int_to_ptr.vmem [resolvable:$true] %s31
      %34 = dma.hbm_to_vmem [thread:$0]  %s30, 128, %s32, [#allocation3]
    $region9: #{tpu_custom_call.1} parent=1 // pred_fallthru
      _
    // Predicated region
    $region10: #{tpu_custom_call.1} parent=1 // pred_check
      _
    $region11: #{tpu_custom_call.1} parent=1 // pred_check_branch
      %36 = sbr.rel (0) target = $region13
    $region12: #{tpu_custom_call.1} parent=1 // pred_region
      %38 = vsyncadd [#allocation6], 0
      %s39 = sshll.u32 %s2, 4
      %s40 = int_to_ptr.hbm [resolvable:$true] %s39
      %s41 = sshll.u32 [#allocation5], 4
      %s42 = int_to_ptr.vmem [resolvable:$true] %s41
      %47 = dma.hbm_to_vmem [thread:$0]  %s40, 128, %s42, [#allocation6], 64, 64, 4
    $region13: #{tpu_custom_call.1} parent=1 // pred_fallthru
      _
    // Predicated region
    $region14: #{tpu_custom_call.1} parent=1 // pred_check
      _
    $region15: #{tpu_custom_call.1} parent=1 // pred_check_branch
      %49 = sbr.rel (0) target = $region17
    $region16: #{tpu_custom_call.1} parent=1 // pred_region
      %51 = vsyncadd [#allocation6], 0
      %s52 = sshll.u32 %s3, 4
      %s53 = int_to_ptr.hbm [resolvable:$true] %s52
      %s54 = sshll.u32 [#allocation7], 4
      %s55 = int_to_ptr.vmem [resolvable:$true] %s54
      %60 = dma.hbm_to_vmem [thread:$0]  %s53, 128, %s55, [#allocation6], 64, 64, 4
    $region17: #{tpu_custom_call.1} parent=1 // pred_fallthru
      _
    // Predicated region
    $region18: #{tpu_custom_call.1} parent=1 // pred_check
      _
    $region19: #{tpu_custom_call.1} parent=1 // pred_check_branch
      %62 = sbr.rel (0) target = $region21
    $region20: #{tpu_custom_call.1} parent=1 // pred_region
      %64 = vsyncadd [#allocation9], 0
      %s65 = sshll.u32 %s4, 4
      %s66 = int_to_ptr.hbm [resolvable:$true] %s65
      %s67 = sshll.u32 [#allocation8], 4
      %s68 = int_to_ptr.vmem [resolvable:$true] %s67
      %73 = dma.hbm_to_vmem [thread:$0]  %s66, 32, %s68, [#allocation9], 16, 16, 1
    $region21: #{tpu_custom_call.1} parent=1 // pred_fallthru
      _
    // Predicated region
    $region22: #{tpu_custom_call.1} parent=1 // pred_check
      _
    $region23: #{tpu_custom_call.1} parent=1 // pred_check_branch
      %75 = sbr.rel (0) target = $region25
    $region24: #{tpu_custom_call.1} parent=1 // pred_region
      _
    $region25: #{tpu_custom_call.1} parent=1 // pred_fallthru
      _
    // Predicated region
    $region26: #{tpu_custom_call.1} parent=1 // pred_check
      _
    $region27: #{tpu_custom_call.1} parent=1 // pred_check_branch
      %77 = sbr.rel (0) target = $region29
    $region28: #{tpu_custom_call.1} parent=1 // pred_region
      _
    $region29: #{tpu_custom_call.1} parent=1 // pred_fallthru
      _
    // Predicated region
    $region30: #{tpu_custom_call.1} parent=1 // pred_check
      _
    $region31: #{tpu_custom_call.1} parent=1 // pred_check_branch
      %79 = sbr.rel (0) target = $region33
    $region32: #{tpu_custom_call.1} parent=1 // pred_region
      _
    $region33: #{tpu_custom_call.1} parent=1 // pred_fallthru
      _
    // Predicated region
    $region34: #{tpu_custom_call.1} parent=1 // pred_check
      _
    $region35: #{tpu_custom_call.1} parent=1 // pred_check_branch
      %81 = sbr.rel (0) target = $region37
    $region36: #{tpu_custom_call.1} parent=1 // pred_region
      _
    $region37: #{tpu_custom_call.1} parent=1 // pred_fallthru
      _
    // Predicated region
    $region38: #{tpu_custom_call.1} parent=1 // pred_check
      _
    $region39: #{tpu_custom_call.1} parent=1 // pred_check_branch
      %83 = sbr.rel (0) target = $region41
    $region40: #{tpu_custom_call.1} parent=1 // pred_region
      _
    $region41: #{tpu_custom_call.1} parent=1 // pred_fallthru
      _
    // Predicated region
    $region42: #{tpu_custom_call.1} parent=1 // pred_check
      _
    $region43: #{tpu_custom_call.1} parent=1 // pred_check_branch
      %85 = sbr.rel (0) target = $region45
    $region44: #{tpu_custom_call.1} parent=1 // pred_region
      _
    $region45: #{tpu_custom_call.1} parent=1 // pred_fallthru
      _
    // Predicated region
    $region46: #{tpu_custom_call.1} parent=1 // pred_check
      _
    $region47: #{tpu_custom_call.1} parent=1 // pred_check_branch
      %87 = sbr.rel (0) target = $region49
    $region48: #{tpu_custom_call.1} parent=1 // pred_region
      %89 = dma.done [#allocation3], 128
    $region49: #{tpu_custom_call.1} parent=1 // pred_fallthru
      _
    // Predicated region
    $region50: #{tpu_custom_call.1} parent=1 // pred_check
      _
    $region51: #{tpu_custom_call.1} parent=1 // pred_check_branch
      %91 = sbr.rel (0) target = $region53
    $region52: #{tpu_custom_call.1} parent=1 // pred_region
      %93 = dma.done [#allocation6], 128
    $region53: #{tpu_custom_call.1} parent=1 // pred_fallthru
      _
    // Predicated region
    $region54: #{tpu_custom_call.1} parent=1 // pred_check
      _
    $region55: #{tpu_custom_call.1} parent=1 // pred_check_branch
      %95 = sbr.rel (0) target = $region57
    $region56: #{tpu_custom_call.1} parent=1 // pred_region
      %97 = dma.done [#allocation6], 128
    $region57: #{tpu_custom_call.1} parent=1 // pred_fallthru
      _
    // Predicated region
    $region58: #{tpu_custom_call.1} parent=1 // pred_check
      _
    $region59: #{tpu_custom_call.1} parent=1 // pred_check_branch
      %99 = sbr.rel (0) target = $region61
    $region60: #{tpu_custom_call.1} parent=1 // pred_region
      %101 = dma.done [#allocation9], 32
    $region61: #{tpu_custom_call.1} parent=1 // pred_fallthru
      _
    %v103 = vld [vmem:[%s0] sm:$0xff]
    %v104 = vld [vmem:[#allocation2] sm:$0xff]
    %v105 = vpack.c.bf16 %v104, %v104
    %v106 = vpack.c.bf16 %v103, %v103
    %v107 = vld [vmem:[#allocation5] sm:$0xf]
    %v108 = vld [vmem:[#allocation7] sm:$0xf]
    %vm109 = vcmask 64512
    %v111 = vsel %vm109, %v105, 0
    %vm113 = vcmask 1043456
    %v115 = vsel %vm113, %v108, 0
    %117 = vmatpush.bf16.msra.mxu0 0
    %118 = vmatpush.bf16.msra.mxu0 0
    %119 = vmatpush.bf16.msra.mxu0 0
    %120 = vmatpush.bf16.msra.mxu0 0
    %121 = vmatpush.bf16.msra.mxu0 0
    %122 = vmatpush.bf16.msra.mxu0 0
    %123 = vmatpush.bf16.msra.mxu0 0
    %124 = vmatpush.bf16.msra.mxu0 %v115
    %125 = vmatmul.bf16.gmra.mxu0 %v111
    %v126 = vpop.f32.mrf.mxu0
    %v127 = vadd.f32 0.0, %v126
    %v128 = vpop.f32.mrf.mxu0
    %129 = vdwg.mxu0
    %v131 = vsel %vm109, %v106, 0
    %v134 = vsel %vm113, %v107, 0
    %136 = vmatpush.bf16.msra.mxu0 0
    %137 = vmatpush.bf16.msra.mxu0 0
    %138 = vmatpush.bf16.msra.mxu0 0
    %139 = vmatpush.bf16.msra.mxu0 0
    %140 = vmatpush.bf16.msra.mxu0 0
    %141 = vmatpush.bf16.msra.mxu0 0
    %142 = vmatpush.bf16.msra.mxu0 0
    %143 = vmatpush.bf16.msra.mxu0 %v134
    %144 = vmatmul.bf16.gmra.mxu0 %v131
    %v145 = vpop.f32.mrf.mxu0
    %v146 = vadd.f32 %v127, %v145
    %v147 = vpop.f32.mrf.mxu0
    %148 = vdwg.mxu0
    %v149 = vld [vmem:[#allocation8] sm:$0x1]
    %v151 = vperm.slane %v149, 0
    %v153 = vadd.f32 %v146, %v151
    %vm154 = vcmp.gt.f32.partialorder %v153, 0.0
    %v155 = vmul.f32 %v153, 0.01
    %v156 = vsel %vm154, %v153, %v155
    %v157 = vpack.c.bf16 %v156, %v156
    %v158 = vld [vmem:[%s5] sm:$0xf]
    %v159 = vld [vmem:[%s5 + $0x4] sm:$0xf]
    %v160 = vld [vmem:[%s5 + $0x8] sm:$0xf]
    %v161 = vld [vmem:[%s5 + $0xc] sm:$0xf]
    %v162 = vld [vmem:[%s5 + $0x10] sm:$0xf]
    %v163 = vld [vmem:[%s5 + $0x14] sm:$0xf]
    %v164 = vld [vmem:[%s5 + $0x18] sm:$0xf]
    %v165 = vld [vmem:[%s5 + $0x1c] sm:$0xf]
    %v166 = vld [vmem:[%s6] sm:$0x1]
    %v168 = vperm.slane %v166, 0
    %v178 = vunpack.c.l.b16 %v158
    %v179 = vunpack.c.l.b16 %v159
    %v180 = vunpack.c.l.b16 %v160
    %v181 = vunpack.c.l.b16 %v161
    %v182 = vunpack.c.l.b16 %v162
    %v183 = vunpack.c.l.b16 %v163
    %v184 = vunpack.c.l.b16 %v164
    %v185 = vunpack.c.l.b16 %v165
    %v186 = vpack.c.b16 %v179, %v178
    %v187 = vpack.c.b16 %v181, %v180
    %v188 = vpack.c.b16 %v183, %v182
    %v189 = vpack.c.b16 %v185, %v184
    %vm194 = vcmask 523264
    %v196 = vsel %vm194, %v157, 0
    %198 = vmatpush.bf16.msra.mxu0 0
    %199 = vmatpush.bf16.msra.mxu0 0
    %200 = vmatpush.bf16.msra.mxu0 0
    %201 = vmatpush.bf16.msra.mxu0 0
    %202 = vmatpush.bf16.msra.mxu0 %v189
    %203 = vmatpush.bf16.msra.mxu0 %v188
    %204 = vmatpush.bf16.msra.mxu0 %v187
    %205 = vmatpush.bf16.msra.mxu0 %v186
    %206 = vmatmul.bf16.gmra.mxu0 %v196
    %v207 = vpop.f32.mrf.mxu0
    %v208 = vadd.f32 %v168, %v207
    %v209 = vpop.f32.mrf.mxu0
    %210 = vdwg.mxu0
    %vm211 = vcmp.gt.f32.partialorder %v208, 0.0
    %v212 = vmul.f32 %v208, 0.01
    %v213 = vsel %vm211, %v208, %v212
    %v214 = vpack.c.bf16 %v213, %v213
    %s215 = scalar_lea.vmem %s5, 32
    %v216 = vld [vmem:[%s215] sm:$0xf]
    %v217 = vld [vmem:[%s215 + $0x4] sm:$0xf]
    %v218 = vld [vmem:[%s215 + $0x8] sm:$0xf]
    %v219 = vld [vmem:[%s215 + $0xc] sm:$0xf]
    %v220 = vld [vmem:[%s215 + $0x10] sm:$0xf]
    %v221 = vld [vmem:[%s215 + $0x14] sm:$0xf]
    %v222 = vld [vmem:[%s215 + $0x18] sm:$0xf]
    %v223 = vld [vmem:[%s215 + $0x1c] sm:$0xf]
    %s224 = scalar_lea.vmem %s6, 1
    %v225 = vld [vmem:[%s224] sm:$0x1]
    %v227 = vperm.slane %v225, 0
    %v237 = vunpack.c.l.b16 %v216
    %v238 = vunpack.c.l.b16 %v217
    %v239 = vunpack.c.l.b16 %v218
    %v240 = vunpack.c.l.b16 %v219
    %v241 = vunpack.c.l.b16 %v220
    %v242 = vunpack.c.l.b16 %v221
    %v243 = vunpack.c.l.b16 %v222
    %v244 = vunpack.c.l.b16 %v223
    %v245 = vpack.c.b16 %v238, %v237
    %v246 = vpack.c.b16 %v240, %v239
    %v247 = vpack.c.b16 %v242, %v241
    %v248 = vpack.c.b16 %v244, %v243
    %v254 = vsel %vm194, %v214, 0
    %256 = vmatpush.bf16.msra.mxu0 0
    %257 = vmatpush.bf16.msra.mxu0 0
    %258 = vmatpush.bf16.msra.mxu0 0
    %259 = vmatpush.bf16.msra.mxu0 0
    %260 = vmatpush.bf16.msra.mxu0 %v248
    %261 = vmatpush.bf16.msra.mxu0 %v247
    %262 = vmatpush.bf16.msra.mxu0 %v246
    %263 = vmatpush.bf16.msra.mxu0 %v245
    %264 = vmatmul.bf16.gmra.mxu0 %v254
    %v265 = vpop.f32.mrf.mxu0
    %v266 = vadd.f32 %v227, %v265
    %v267 = vpop.f32.mrf.mxu0
    %268 = vdwg.mxu0
    %vm269 = vcmp.gt.f32.partialorder %v266, 0.0
    %v270 = vmul.f32 %v266, 0.01
    %v271 = vsel %vm269, %v266, %v270
    %v272 = vpack.c.bf16 %v271, %v271
    %v273 = vld [vmem:[%s7] sm:$0xf]
    %v274 = vld [vmem:[%s7 + $0x4] sm:$0xf]
    %v275 = vld [vmem:[%s7 + $0x8] sm:$0xf]
    %v276 = vld [vmem:[%s7 + $0xc] sm:$0xf]
    %v277 = vld [vmem:[%s7 + $0x10] sm:$0xf]
    %v278 = vld [vmem:[%s7 + $0x14] sm:$0xf]
    %v279 = vld [vmem:[%s7 + $0x18] sm:$0xf]
    %v280 = vld [vmem:[%s7 + $0x1c] sm:$0xf]
    %v281 = vld [vmem:[%s9] sm:$0x1]
    %v283 = vperm.slane %v281, 0
    %v293 = vunpack.c.l.b16 %v273
    %v294 = vunpack.c.l.b16 %v274
    %v295 = vunpack.c.l.b16 %v275
    %v296 = vunpack.c.l.b16 %v276
    %v297 = vunpack.c.l.b16 %v277
    %v298 = vunpack.c.l.b16 %v278
    %v299 = vunpack.c.l.b16 %v279
    %v300 = vunpack.c.l.b16 %v280
    %v301 = vpack.c.b16 %v294, %v293
    %v302 = vpack.c.b16 %v296, %v295
    %v303 = vpack.c.b16 %v298, %v297
    %v304 = vpack.c.b16 %v300, %v299
    %v310 = vsel %vm194, %v272, 0
    %312 = vmatpush.bf16.msra.mxu0 0
    %313 = vmatpush.bf16.msra.mxu0 0
    %314 = vmatpush.bf16.msra.mxu0 0
    %315 = vmatpush.bf16.msra.mxu0 0
    %316 = vmatpush.bf16.msra.mxu0 %v304
    %317 = vmatpush.bf16.msra.mxu0 %v303
    %318 = vmatpush.bf16.msra.mxu0 %v302
    %319 = vmatpush.bf16.msra.mxu0 %v301
    %320 = vmatmul.bf16.gmra.mxu0 %v310
    %v321 = vpop.f32.mrf.mxu0
    %v322 = vadd.f32 %v283, %v321
    %v323 = vpop.f32.mrf.mxu0
    %324 = vdwg.mxu0
    %v325 = vld [vmem:[%s8] sm:$0xf]
    %v326 = vld [vmem:[%s8 + $0x4] sm:$0xf]
    %v327 = vld [vmem:[%s8 + $0x8] sm:$0xf]
    %v328 = vld [vmem:[%s8 + $0xc] sm:$0xf]
    %v329 = vld [vmem:[%s8 + $0x10] sm:$0xf]
    %v330 = vld [vmem:[%s8 + $0x14] sm:$0xf]
    %v331 = vld [vmem:[%s8 + $0x18] sm:$0xf]
    %v332 = vld [vmem:[%s8 + $0x1c] sm:$0xf]
    %v333 = vld [vmem:[%s10] sm:$0x1]
    %v335 = vperm.slane %v333, 0
    %v345 = vunpack.c.l.b16 %v325
    %v346 = vunpack.c.l.b16 %v326
    %v347 = vunpack.c.l.b16 %v327
    %v348 = vunpack.c.l.b16 %v328
    %v349 = vunpack.c.l.b16 %v329
    %v350 = vunpack.c.l.b16 %v330
    %v351 = vunpack.c.l.b16 %v331
    %v352 = vunpack.c.l.b16 %v332
    %v353 = vpack.c.b16 %v346, %v345
    %v354 = vpack.c.b16 %v348, %v347
    %v355 = vpack.c.b16 %v350, %v349
    %v356 = vpack.c.b16 %v352, %v351
    %361 = vmatpush.bf16.msra.mxu0 0
    %362 = vmatpush.bf16.msra.mxu0 0
    %363 = vmatpush.bf16.msra.mxu0 0
    %364 = vmatpush.bf16.msra.mxu0 0
    %365 = vmatpush.bf16.msra.mxu0 %v356
    %366 = vmatpush.bf16.msra.mxu0 %v355
    %367 = vmatpush.bf16.msra.mxu0 %v354
    %368 = vmatpush.bf16.msra.mxu0 %v353
    %369 = vmatmul.bf16.gmra.mxu0 %v310
    %v370 = vpop.f32.mrf.mxu0
    %v371 = vadd.f32 %v335, %v370
    %v372 = vpop.f32.mrf.mxu0
    %373 = vdwg.mxu0
    %v374 = vtanh.pop %v322
    %v375 = vsel %vm109, %v374, 0.0
    %376 = vadd.xlane.f32.xlu0 %v375
    %v377 = vpop.xlane.xlu0 %376
    %v378 = vadd.f32 %v377, 0.0
    %v379 = vmul.f32 %v374, 1.442695
    %v380 = vpow.pop %v379
    %382 = vrot.lane.b32.xlu0 %v380, 8
    %v383 = vpop.permute.xlu0 %382
    %v385 = vmul.f32 %v103, %v383
    %387 = vrot.lane.b32.xlu0 %v371, 8
    %v388 = vpop.permute.xlu0 %387
    %v390 = vadd.f32 %v385, %v388
    %v391 = vpack.c.bf16 %v390, %v390
    %s392 = scalar_lea.vmem [#allocation5], 4
    %v393 = vld [vmem:[%s392] sm:$0xf]
    %s394 = scalar_lea.vmem [#allocation7], 4
    %v395 = vld [vmem:[%s394] sm:$0xf]
    %v397 = vsel %vm113, %v395, 0
    %399 = vmatpush.bf16.msra.mxu0 0
    %400 = vmatpush.bf16.msra.mxu0 0
    %401 = vmatpush.bf16.msra.mxu0 0
    %402 = vmatpush.bf16.msra.mxu0 0
    %403 = vmatpush.bf16.msra.mxu0 0
    %404 = vmatpush.bf16.msra.mxu0 0
    %405 = vmatpush.bf16.msra.mxu0 0
    %406 = vmatpush.bf16.msra.mxu0 %v397
    %407 = vmatmul.bf16.gmra.mxu0 %v111
    %v408 = vpop.f32.mrf.mxu0
    %v409 = vadd.f32 0.0, %v408
    %v410 = vpop.f32.mrf.mxu0
    %411 = vdwg.mxu0
    %413 = vrot.lane.b32.xlu0 %v391, 120
    %v414 = vpop.permute.xlu0 %413
    %v416 = vsel %vm109, %v414, 0
    %v419 = vsel %vm113, %v393, 0
    %421 = vmatpush.bf16.msra.mxu0 0
    %422 = vmatpush.bf16.msra.mxu0 0
    %423 = vmatpush.bf16.msra.mxu0 0
    %424 = vmatpush.bf16.msra.mxu0 0
    %425 = vmatpush.bf16.msra.mxu0 0
    %426 = vmatpush.bf16.msra.mxu0 0
    %427 = vmatpush.bf16.msra.mxu0 0
    %428 = vmatpush.bf16.msra.mxu0 %v419
    %429 = vmatmul.bf16.gmra.mxu0 %v416
    %v430 = vpop.f32.mrf.mxu0
    %v431 = vadd.f32 %v409, %v430
    %v432 = vpop.f32.mrf.mxu0
    %433 = vdwg.mxu0
    %s434 = scalar_lea.vmem [#allocation8], 1
    %v435 = vld [vmem:[%s434] sm:$0x1]
    %v437 = vperm.slane %v435, 0
    %v439 = vadd.f32 %v431, %v437
    %vm440 = vcmp.gt.f32.partialorder %v439, 0.0
    %v441 = vmul.f32 %v439, 0.01
    %v442 = vsel %vm440, %v439, %v441
    %v443 = vpack.c.bf16 %v442, %v442
    %s444 = scalar_lea.vmem %s5, 64
    %v445 = vld [vmem:[%s444] sm:$0xf]
    %v446 = vld [vmem:[%s444 + $0x4] sm:$0xf]
    %v447 = vld [vmem:[%s444 + $0x8] sm:$0xf]
    %v448 = vld [vmem:[%s444 + $0xc] sm:$0xf]
    %v449 = vld [vmem:[%s444 + $0x10] sm:$0xf]
    %v450 = vld [vmem:[%s444 + $0x14] sm:$0xf]
    %v451 = vld [vmem:[%s444 + $0x18] sm:$0xf]
    %v452 = vld [vmem:[%s444 + $0x1c] sm:$0xf]
    %s453 = scalar_lea.vmem %s6, 2
    %v454 = vld [vmem:[%s453] sm:$0x1]
    %v456 = vperm.slane %v454, 0
    %v466 = vunpack.c.l.b16 %v445
    %v467 = vunpack.c.l.b16 %v446
    %v468 = vunpack.c.l.b16 %v447
    %v469 = vunpack.c.l.b16 %v448
    %v470 = vunpack.c.l.b16 %v449
    %v471 = vunpack.c.l.b16 %v450
    %v472 = vunpack.c.l.b16 %v451
    %v473 = vunpack.c.l.b16 %v452
    %v474 = vpack.c.b16 %v467, %v466
    %v475 = vpack.c.b16 %v469, %v468
    %v476 = vpack.c.b16 %v471, %v470
    %v477 = vpack.c.b16 %v473, %v472
    %v483 = vsel %vm194, %v443, 0
    %485 = vmatpush.bf16.msra.mxu0 0
    %486 = vmatpush.bf16.msra.mxu0 0
    %487 = vmatpush.bf16.msra.mxu0 0
    %488 = vmatpush.bf16.msra.mxu0 0
    %489 = vmatpush.bf16.msra.mxu0 %v477
    %490 = vmatpush.bf16.msra.mxu0 %v476
    %491 = vmatpush.bf16.msra.mxu0 %v475
    %492 = vmatpush.bf16.msra.mxu0 %v474
    %493 = vmatmul.bf16.gmra.mxu0 %v483
    %v494 = vpop.f32.mrf.mxu0
    %v495 = vadd.f32 %v456, %v494
    %v496 = vpop.f32.mrf.mxu0
    %497 = vdwg.mxu0
    %vm498 = vcmp.gt.f32.partialorder %v495, 0.0
    %v499 = vmul.f32 %v495, 0.01
    %v500 = vsel %vm498, %v495, %v499
    %v501 = vpack.c.bf16 %v500, %v500
    %s502 = scalar_lea.vmem %s5, 96
    %v503 = vld [vmem:[%s502] sm:$0xf]
    %v504 = vld [vmem:[%s502 + $0x4] sm:$0xf]
    %v505 = vld [vmem:[%s502 + $0x8] sm:$0xf]
    %v506 = vld [vmem:[%s502 + $0xc] sm:$0xf]
    %v507 = vld [vmem:[%s502 + $0x10] sm:$0xf]
    %v508 = vld [vmem:[%s502 + $0x14] sm:$0xf]
    %v509 = vld [vmem:[%s502 + $0x18] sm:$0xf]
    %v510 = vld [vmem:[%s502 + $0x1c] sm:$0xf]
    %s511 = scalar_lea.vmem %s6, 3
    %v512 = vld [vmem:[%s511] sm:$0x1]
    %v514 = vperm.slane %v512, 0
    %v524 = vunpack.c.l.b16 %v503
    %v525 = vunpack.c.l.b16 %v504
    %v526 = vunpack.c.l.b16 %v505
    %v527 = vunpack.c.l.b16 %v506
    %v528 = vunpack.c.l.b16 %v507
    %v529 = vunpack.c.l.b16 %v508
    %v530 = vunpack.c.l.b16 %v509
    %v531 = vunpack.c.l.b16 %v510
    %v532 = vpack.c.b16 %v525, %v524
    %v533 = vpack.c.b16 %v527, %v526
    %v534 = vpack.c.b16 %v529, %v528
    %v535 = vpack.c.b16 %v531, %v530
    %v541 = vsel %vm194, %v501, 0
    %543 = vmatpush.bf16.msra.mxu0 0
    %544 = vmatpush.bf16.msra.mxu0 0
    %545 = vmatpush.bf16.msra.mxu0 0
    %546 = vmatpush.bf16.msra.mxu0 0
    %547 = vmatpush.bf16.msra.mxu0 %v535
    %548 = vmatpush.bf16.msra.mxu0 %v534
    %549 = vmatpush.bf16.msra.mxu0 %v533
    %550 = vmatpush.bf16.msra.mxu0 %v532
    %551 = vmatmul.bf16.gmra.mxu0 %v541
    %v552 = vpop.f32.mrf.mxu0
    %v553 = vadd.f32 %v514, %v552
    %v554 = vpop.f32.mrf.mxu0
    %555 = vdwg.mxu0
    %vm556 = vcmp.gt.f32.partialorder %v553, 0.0
    %v557 = vmul.f32 %v553, 0.01
    %v558 = vsel %vm556, %v553, %v557
    %v559 = vpack.c.bf16 %v558, %v558
    %s560 = scalar_lea.vmem %s7, 32
    %v561 = vld [vmem:[%s560] sm:$0xf]
    %v562 = vld [vmem:[%s560 + $0x4] sm:$0xf]
    %v563 = vld [vmem:[%s560 + $0x8] sm:$0xf]
    %v564 = vld [vmem:[%s560 + $0xc] sm:$0xf]
    %v565 = vld [vmem:[%s560 + $0x10] sm:$0xf]
    %v566 = vld [vmem:[%s560 + $0x14] sm:$0xf]
    %v567 = vld [vmem:[%s560 + $0x18] sm:$0xf]
    %v568 = vld [vmem:[%s560 + $0x1c] sm:$0xf]
    %s569 = scalar_lea.vmem %s9, 1
    %v570 = vld [vmem:[%s569] sm:$0x1]
    %v572 = vperm.slane %v570, 0
    %v582 = vunpack.c.l.b16 %v561
    %v583 = vunpack.c.l.b16 %v562
    %v584 = vunpack.c.l.b16 %v563
    %v585 = vunpack.c.l.b16 %v564
    %v586 = vunpack.c.l.b16 %v565
    %v587 = vunpack.c.l.b16 %v566
    %v588 = vunpack.c.l.b16 %v567
    %v589 = vunpack.c.l.b16 %v568
    %v590 = vpack.c.b16 %v583, %v582
    %v591 = vpack.c.b16 %v585, %v584
    %v592 = vpack.c.b16 %v587, %v586
    %v593 = vpack.c.b16 %v589, %v588
    %v599 = vsel %vm194, %v559, 0
    %601 = vmatpush.bf16.msra.mxu0 0
    %602 = vmatpush.bf16.msra.mxu0 0
    %603 = vmatpush.bf16.msra.mxu0 0
    %604 = vmatpush.bf16.msra.mxu0 0
    %605 = vmatpush.bf16.msra.mxu0 %v593
    %606 = vmatpush.bf16.msra.mxu0 %v592
    %607 = vmatpush.bf16.msra.mxu0 %v591
    %608 = vmatpush.bf16.msra.mxu0 %v590
    %609 = vmatmul.bf16.gmra.mxu0 %v599
    %v610 = vpop.f32.mrf.mxu0
    %v611 = vadd.f32 %v572, %v610
    %v612 = vpop.f32.mrf.mxu0
    %613 = vdwg.mxu0
    %s614 = scalar_lea.vmem %s8, 32
    %v615 = vld [vmem:[%s614] sm:$0xf]
    %v616 = vld [vmem:[%s614 + $0x4] sm:$0xf]
    %v617 = vld [vmem:[%s614 + $0x8] sm:$0xf]
    %v618 = vld [vmem:[%s614 + $0xc] sm:$0xf]
    %v619 = vld [vmem:[%s614 + $0x10] sm:$0xf]
    %v620 = vld [vmem:[%s614 + $0x14] sm:$0xf]
    %v621 = vld [vmem:[%s614 + $0x18] sm:$0xf]
    %v622 = vld [vmem:[%s614 + $0x1c] sm:$0xf]
    %s623 = scalar_lea.vmem %s10, 1
    %v624 = vld [vmem:[%s623] sm:$0x1]
    %v626 = vperm.slane %v624, 0
    %v636 = vunpack.c.l.b16 %v615
    %v637 = vunpack.c.l.b16 %v616
    %v638 = vunpack.c.l.b16 %v617
    %v639 = vunpack.c.l.b16 %v618
    %v640 = vunpack.c.l.b16 %v619
    %v641 = vunpack.c.l.b16 %v620
    %v642 = vunpack.c.l.b16 %v621
    %v643 = vunpack.c.l.b16 %v622
    %v644 = vpack.c.b16 %v637, %v636
    %v645 = vpack.c.b16 %v639, %v638
    %v646 = vpack.c.b16 %v641, %v640
    %v647 = vpack.c.b16 %v643, %v642
    %652 = vmatpush.bf16.msra.mxu0 0
    %653 = vmatpush.bf16.msra.mxu0 0
    %654 = vmatpush.bf16.msra.mxu0 0
    %655 = vmatpush.bf16.msra.mxu0 0
    %656 = vmatpush.bf16.msra.mxu0 %v647
    %657 = vmatpush.bf16.msra.mxu0 %v646
    %658 = vmatpush.bf16.msra.mxu0 %v645
    %659 = vmatpush.bf16.msra.mxu0 %v644
    %660 = vmatmul.bf16.gmra.mxu0 %v599
    %v661 = vpop.f32.mrf.mxu0
    %v662 = vadd.f32 %v626, %v661
    %v663 = vpop.f32.mrf.mxu0
    %664 = vdwg.mxu0
    %v665 = vtanh.pop %v611
    %v666 = vsel %vm109, %v665, 0.0
    %667 = vadd.xlane.f32.xlu0 %v666
    %v668 = vpop.xlane.xlu0 %667
    %v669 = vadd.f32 %v378, %v668
    %v670 = vmul.f32 %v665, 1.442695
    %v671 = vpow.pop %v670
    %v672 = vmul.f32 %v103, %v671
    %v673 = vadd.f32 %v672, %v662
    %675 = vrot.lane.b32.xlu0 %v390, 120
    %v676 = vpop.permute.xlu0 %675
    %678 = vst.msk [vmem:[#allocation10] sm:$0xff] %vm109, %v676
    %680 = vrot.lane.b32.xlu0 %v673, 8
    %v681 = vpop.permute.xlu0 %680
    %vm683 = vcmask 130112
    %684 = vst.msk [vmem:[#allocation10] sm:$0xff] %vm683, %v681
    %vm685 = vcmask 7168
    %686 = vst.msk [vmem:[%s12] sm:$0xff] %vm685, %v669
    // Predicated region
    $region62: #{tpu_custom_call.1} parent=1 // pred_check
      _
    $region63: #{tpu_custom_call.1} parent=1 // pred_check_branch
      %688 = sbr.rel (0) target = $region65
    $region64: #{tpu_custom_call.1} parent=1 // pred_region
      %690 = vsyncadd [#allocation4], 0
      %s692 = sshll.u32 [#allocation10], 4
      %s693 = int_to_ptr.vmem [resolvable:$true] %s692
      %s694 = sshll.u32 %s11, 4
      %s695 = int_to_ptr.hbm [resolvable:$true] %s694
      %697 = dma.vmem_to_hbm [thread:$0]  %s693, 128, %s695, [#allocation4]
    $region65: #{tpu_custom_call.1} parent=1 // pred_fallthru
      _
    // Predicated region
    $region66: #{tpu_custom_call.1} parent=1 // pred_check
      _
    $region67: #{tpu_custom_call.1} parent=1 // pred_check_branch
      %699 = sbr.rel (0) target = $region69
    $region68: #{tpu_custom_call.1} parent=1 // pred_region
      _
    $region69: #{tpu_custom_call.1} parent=1 // pred_fallthru
      _
    // Predicated region
    $region70: #{tpu_custom_call.1} parent=1 // pred_check
      _
    $region71: #{tpu_custom_call.1} parent=1 // pred_check_branch
      %701 = sbr.rel (0) target = $region73
    $region72: #{tpu_custom_call.1} parent=1 // pred_region
      %703 = dma.done [#allocation4], 128
    $region73: #{tpu_custom_call.1} parent=1 // pred_fallthru
      _
    // Predicated region
    $region74: #{tpu_custom_call.1} parent=1 // pred_check
      _
    $region75: #{tpu_custom_call.1} parent=1 // pred_check_branch
      %705 = sbr.rel (0) target = $region77
    $region76: #{tpu_custom_call.1} parent=1 // pred_region
      _
    $region77: #{tpu_custom_call.1} parent=1 // pred_fallthru
      _
    %706 = vsyncpa [#allocation3], 1
    %707 = vsyncpa [#allocation6], 1
    %708 = vsyncpa [#allocation9], 1
    %709 = vsyncpa [#allocation4], 1

</llo_original>
